<compile_context>
chip_gen: v5e
topology: v5e:2x2
jax: 0.10.0
libtpu: 0.0.40
codegen_flags: <defaults>
</compile_context>

<pallas_src>
import jax
import jax.numpy as jnp
from jax.experimental import pallas as pl
from jax.experimental.pallas import tpu as pltpu


def _pick_row_tile(h, cap=128):
    """Largest divisor of h that is <= cap, preferring multiples of 8."""
    divs = [t for t in range(1, h + 1) if h % t == 0 and t <= cap]
    if not divs:
        return h
    mult8 = [t for t in divs if t % 8 == 0]
    return max(mult8) if mult8 else max(divs)


def _pick_w_tile(w, cout, max_lanes=256):
    """Largest divisor of w with Wt*Cout <= max_lanes, preferring 128-lane multiples."""
    divs = [t for t in range(1, w + 1) if w % t == 0 and t * cout <= max_lanes]
    if not divs:
        return 1
    dense = [t for t in divs if (t * cout) % 128 == 0]
    return max(dense) if dense else max(divs)


def _pack_band_weights(w_hwio, wt):
    """Fold the 3 horizontal taps into a band-diagonal ((Wt+2)*Cin, Wt*Cout) weight
    per vertical tap i, so out[:, v*Cout+o] = sum_j xwin[:, (v+j)*Cin + c] * w[i,j,c,o]."""
    _, _, cin, cout = w_hwio.shape
    p = wt + 2
    bands = []
    for i in range(3):
        band = jnp.zeros((p, cin, wt, cout), jnp.float32)
        for j in range(3):
            sel = jnp.zeros((p, wt), jnp.float32)
            sel = sel.at[jnp.arange(wt) + j, jnp.arange(wt)].set(1.0)
            band = band + jnp.einsum('pv,io->pivo', sel, w_hwio[i, j].astype(jnp.float32))
        bands.append(band.reshape(p * cin, wt * cout))
    return jnp.stack(bands, axis=0)          # (3, (Wt+2)*Cin, Wt*Cout)


def _make_kernel(th, lanes):
    def kernel(x_ref, w_ref, b_ref, o_ref):
        # x_ref: (TH+2, (Wt+2)*Cin)      bf16 halo window
        # w_ref: (3, (Wt+2)*Cin, Wt*Cout) bf16 band-diagonal weights
        # b_ref: (1, Wt*Cout)             f32
        # o_ref: (TH, Wt*Cout)            f32, lane-dense store
        acc = jnp.zeros((th, lanes), jnp.float32)
        for i in range(3):                               # 3 vertical taps, unrolled
            acc = acc + jnp.dot(x_ref[i:i + th, :], w_ref[i],
                                preferred_element_type=jnp.float32)
        acc = acc + b_ref[...]
        o_ref[...] = jnp.maximum(acc, 0.2 * acc).astype(o_ref.dtype)   # LeakyReLU(0.2)
    return kernel


def conv3x3_lrelu_pallas(x_nhwc, w_hwio, b, *, stream_dtype=jnp.bfloat16):
    """3x3 conv, stride=1, padding=1, fused LeakyReLU(0.2). NHWC float32 in/out.
    Matmul streams run in `stream_dtype` (bf16 default); accumulation is float32.
    Pass stream_dtype=jnp.float32 for bit-faithful f32 module numerics."""
    N, H, W, Cin = x_nhwc.shape
    kh, kw, _, Cout = w_hwio.shape
    assert (kh, kw) == (3, 3)

    TH = _pick_row_tile(H)
    Wt = _pick_w_tile(W, Cout)
    nH, nW = H // TH, W // Wt
    KX = (Wt + 2) * Cin          # matmul K
    L = Wt * Cout                # matmul lane width / output minor dim

    # --- host/XLA glue: pad once, lay out overlapping halo windows ------------
    xp = jnp.pad(x_nhwc.astype(stream_dtype), ((0, 0), (1, 1), (1, 1), (0, 0)))
    rows = jnp.arange(nH)[:, None] * TH + jnp.arange(TH + 2)[None, :]   # (nH, TH+2)
    cols = jnp.arange(nW)[:, None] * Wt + jnp.arange(Wt + 2)[None, :]   # (nW, Wt+2)
    xw = xp[:, rows][:, :, :, cols]                 # (N, nH, TH+2, nW, Wt+2, Cin)
    xw = xw.transpose(0, 1, 3, 2, 4, 5).reshape(N, nH, nW, TH + 2, KX)

    w_band = _pack_band_weights(w_hwio, Wt).astype(stream_dtype)        # (3, KX, L)
    b_big = jnp.tile(b.astype(jnp.float32), Wt).reshape(1, L)

    kernel = _make_kernel(TH, L)

    esize = xw.dtype.itemsize
    # MXU work actually issued (includes band-diagonal zeros); true conv FLOPs
    # would be 2*N*H*W*9*Cin*Cout.
    mxu_flops = 2 * N * nH * nW * 3 * TH * KX * L
    bytes_accessed = (xw.size * esize + w_band.size * esize
                      + b_big.size * 4 + N * nH * nW * TH * L * 4)

    # Explicit VMEM budget (double-buffered in/out + double-buffered weight/bias
    # + headroom), floored at 32 MiB — safe on v5e/v6e/v7x.
    in_blk = (TH + 2) * max(KX, 128) * esize
    out_blk = TH * max(L, 128) * 4
    w_blk = 3 * max(KX, 128) * ((L + 127) // 128 * 128) * esize + 8 * 128 * 4
    vmem_limit = int(min(max(2 * (in_blk + out_blk + w_blk) + (8 << 20), 32 << 20),
                         100 << 20))

    out = pl.pallas_call(
        kernel,
        out_shape=jax.ShapeDtypeStruct((N, nH, nW, TH, L), jnp.float32),
        grid_spec=pltpu.PrefetchScalarGridSpec(
            num_scalar_prefetch=0,
            grid=(N, nH, nW),
            in_specs=[
                pl.BlockSpec((None, None, None, TH + 2, KX),
                             lambda n, h, w: (n, h, w, 0, 0)),
                pl.BlockSpec((3, KX, L), lambda n, h, w: (0, 0, 0)),
                pl.BlockSpec((1, L), lambda n, h, w: (0, 0)),
            ],
            out_specs=pl.BlockSpec((None, None, None, TH, L),
                                   lambda n, h, w: (n, h, w, 0, 0)),
        ),
        compiler_params=pltpu.CompilerParams(
            dimension_semantics=("parallel", "parallel", "parallel"),
            vmem_limit_bytes=vmem_limit),
        cost_estimate=pl.CostEstimate(
            flops=mxu_flops, transcendentals=0, bytes_accessed=int(bytes_accessed)),
    )(xw, w_band, b_big)

    # (N, nH, nW, TH, Wt*Cout) -> (N, H, W, Cout)
    y = out.reshape(N, nH, nW, TH, Wt, Cout)
    y = y.transpose(0, 1, 3, 2, 4, 5).reshape(N, H, W, Cout)
    return y


def init_single_conv_params(key, in_ch, out_ch):
    """Deterministic synthetic parameters, stored directly in HWIO layout."""
    k1, k2 = jax.random.split(key)
    w = jax.random.normal(k1, (3, 3, in_ch, out_ch), jnp.float32) * 0.1
    b = jax.random.normal(k2, (out_ch,), jnp.float32) * 0.1
    return (w, b)


@jax.jit
def single_conv(x_nchw, params):
    """Forward matching the PyTorch module: Conv2d(3x3,s=1,p=1) + LeakyReLU(0.2). NCHW io."""
    w, b = params
    x = jnp.transpose(x_nchw, (0, 2, 3, 1))    # NCHW -> NHWC
    y = conv3x3_lrelu_pallas(x, w, b)
    return jnp.transpose(y, (0, 3, 1, 2))      # NHWC -> NCHW


def _reference(x_nchw, params, stream_dtype=jnp.float32):
    """Pure-JAX reference (lax conv); optional bf16 streams with f32 accumulation."""
    w, b = params
    x = jnp.transpose(x_nchw, (0, 2, 3, 1)).astype(stream_dtype)
    w = w.astype(stream_dtype)
    dn = jax.lax.conv_dimension_numbers(x.shape, w.shape, ("NHWC", "HWIO", "NHWC"))
    y = jax.lax.conv_general_dilated(x, w, window_strides=(1, 1),
                                     padding=[(1, 1), (1, 1)], dimension_numbers=dn,
                                     preferred_element_type=jnp.float32)
    y = y + b.astype(jnp.float32)
    y = jnp.where(y >= 0, y, 0.2 * y)
    return jnp.transpose(y, (0, 3, 1, 2))


if __name__ == "__main__":
    key = jax.random.PRNGKey(0)
    kx, kp = jax.random.split(key)

    N, in_ch, out_ch, H, W = 2, 4, 8, 16, 16
    x = jax.random.normal(kx, (N, in_ch, H, W), jnp.float32)
    params = init_single_conv_params(kp, in_ch, out_ch)

    out = jax.block_until_ready(single_conv(x, params))
    assert out.shape == (N, out_ch, H, W), out.shape

    # Tight check vs a reference that also streams bf16 (f32 accumulation in both).
    ref_bf16 = jax.block_until_ready(_reference(x, params, stream_dtype=jnp.bfloat16))
    assert jnp.allclose(out, ref_bf16, atol=2e-3, rtol=2e-3), \
        float(jnp.max(jnp.abs(out - ref_bf16)))

    # Looser sanity check vs exact f32 module semantics (bf16 stream quantization only).
    ref_f32 = jax.block_until_ready(_reference(x, params))
    assert jnp.allclose(out, ref_f32, atol=5e-2, rtol=5e-2), \
        float(jnp.max(jnp.abs(out - ref_f32)))

    print("KERNEL_OK")
</pallas_src>

<mosaic_0001>
module attributes {stable_mosaic.version = 11 : i64} {
  func.func @kernel(%arg0: i32, %arg1: i32, %arg2: i32, %arg3: memref<1x1x1x18x72xbf16, #tpu.memory_space<vmem>>, %arg4: memref<3x72x128xbf16, #tpu.memory_space<vmem>>, %arg5: memref<1x128xf32, #tpu.memory_space<vmem>>, %arg6: memref<1x1x1x16x128xf32, #tpu.memory_space<vmem>>) attributes {dimension_semantics = [#tpu.dimension_semantics<parallel>, #tpu.dimension_semantics<parallel>, #tpu.dimension_semantics<parallel>], iteration_bounds = array<i64: 2, 1, 1>, scalar_prefetch = 0 : i64, scratch_operands = 0 : i64, tpu.core_type = #tpu.core_type<tc>, window_params = [{transform_indices = @transform_0, window_bounds = array<i64: 1, 1, 1, 18, 72>}, {pipeline_mode = #tpu.pipeline_mode<synchronous>, transform_indices = @transform_1, window_bounds = array<i64: 3, 72, 128>}, {pipeline_mode = #tpu.pipeline_mode<synchronous>, transform_indices = @transform_2, window_bounds = array<i64: 1, 128>}, {transform_indices = @transform_3, window_bounds = array<i64: 1, 1, 1, 16, 128>}]} {
    %cst = arith.constant 0.000000e+00 : f32
    %0 = vector.broadcast %cst : f32 to vector<16x128xf32>
    %c0 = arith.constant 0 : index
    %c0_0 = arith.constant 0 : index
    %c0_1 = arith.constant 0 : index
    %c0_2 = arith.constant 0 : index
    %c0_3 = arith.constant 0 : index
    %1 = vector.load %arg3[%c0, %c0_0, %c0_1, %c0_2, %c0_3] : memref<1x1x1x18x72xbf16, #tpu.memory_space<vmem>>, vector<1x1x1x16x72xbf16>
    %2 = vector.shape_cast %1 : vector<1x1x1x16x72xbf16> to vector<16x72xbf16>
    %c0_4 = arith.constant 0 : index
    %c0_5 = arith.constant 0 : index
    %c0_6 = arith.constant 0 : index
    %3 = vector.load %arg4[%c0_4, %c0_5, %c0_6] : memref<3x72x128xbf16, #tpu.memory_space<vmem>>, vector<1x72x128xbf16>
    %4 = vector.shape_cast %3 : vector<1x72x128xbf16> to vector<72x128xbf16>
    %cst_7 = arith.constant dense<0.000000e+00> : vector<16x128xf32>
    %5 = tpu.matmul %2, %4, %cst_7 {dimension_numbers = #tpu.dot_dimension_numbers<[1], [0], [0], [1], [0, 0, 1, 1], [], []>} : vector<16x72xbf16>, vector<72x128xbf16>, vector<16x128xf32> -> vector<16x128xf32>
    %6 = arith.addf %0, %5 : vector<16x128xf32>
    %c0_8 = arith.constant 0 : index
    %c0_9 = arith.constant 0 : index
    %c0_10 = arith.constant 0 : index
    %c1 = arith.constant 1 : index
    %c0_11 = arith.constant 0 : index
    %7 = vector.load %arg3[%c0_8, %c0_9, %c0_10, %c1, %c0_11] : memref<1x1x1x18x72xbf16, #tpu.memory_space<vmem>>, vector<1x1x1x16x72xbf16>
    %8 = vector.shape_cast %7 : vector<1x1x1x16x72xbf16> to vector<16x72xbf16>
    %c1_12 = arith.constant 1 : index
    %c0_13 = arith.constant 0 : index
    %c0_14 = arith.constant 0 : index
    %9 = vector.load %arg4[%c1_12, %c0_13, %c0_14] : memref<3x72x128xbf16, #tpu.memory_space<vmem>>, vector<1x72x128xbf16>
    %10 = vector.shape_cast %9 : vector<1x72x128xbf16> to vector<72x128xbf16>
    %cst_15 = arith.constant dense<0.000000e+00> : vector<16x128xf32>
    %11 = tpu.matmul %8, %10, %cst_15 {dimension_numbers = #tpu.dot_dimension_numbers<[1], [0], [0], [1], [0, 0, 1, 1], [], []>} : vector<16x72xbf16>, vector<72x128xbf16>, vector<16x128xf32> -> vector<16x128xf32>
    %12 = arith.addf %6, %11 : vector<16x128xf32>
    %c0_16 = arith.constant 0 : index
    %c0_17 = arith.constant 0 : index
    %c0_18 = arith.constant 0 : index
    %c2 = arith.constant 2 : index
    %c0_19 = arith.constant 0 : index
    %13 = vector.load %arg3[%c0_16, %c0_17, %c0_18, %c2, %c0_19] : memref<1x1x1x18x72xbf16, #tpu.memory_space<vmem>>, vector<1x1x1x16x72xbf16>
    %14 = vector.shape_cast %13 : vector<1x1x1x16x72xbf16> to vector<16x72xbf16>
    %c2_20 = arith.constant 2 : index
    %c0_21 = arith.constant 0 : index
    %c0_22 = arith.constant 0 : index
    %15 = vector.load %arg4[%c2_20, %c0_21, %c0_22] : memref<3x72x128xbf16, #tpu.memory_space<vmem>>, vector<1x72x128xbf16>
    %16 = vector.shape_cast %15 : vector<1x72x128xbf16> to vector<72x128xbf16>
    %cst_23 = arith.constant dense<0.000000e+00> : vector<16x128xf32>
    %17 = tpu.matmul %14, %16, %cst_23 {dimension_numbers = #tpu.dot_dimension_numbers<[1], [0], [0], [1], [0, 0, 1, 1], [], []>} : vector<16x72xbf16>, vector<72x128xbf16>, vector<16x128xf32> -> vector<16x128xf32>
    %18 = arith.addf %12, %17 : vector<16x128xf32>
    %c0_24 = arith.constant 0 : index
    %c0_25 = arith.constant 0 : index
    %19 = vector.load %arg5[%c0_24, %c0_25] : memref<1x128xf32, #tpu.memory_space<vmem>>, vector<1x128xf32>
    %20 = vector.broadcast %19 : vector<1x128xf32> to vector<16x128xf32>
    %21 = arith.addf %18, %20 : vector<16x128xf32>
    %cst_26 = arith.constant 2.000000e-01 : f32
    %22 = vector.broadcast %cst_26 : f32 to vector<16x128xf32>
    %23 = arith.mulf %22, %21 : vector<16x128xf32>
    %24 = arith.maximumf %21, %23 : vector<16x128xf32>
    %c0_27 = arith.constant 0 : index
    %c0_28 = arith.constant 0 : index
    %c0_29 = arith.constant 0 : index
    %c0_30 = arith.constant 0 : index
    %c0_31 = arith.constant 0 : index
    %25 = vector.load %arg6[%c0_27, %c0_28, %c0_29, %c0_30, %c0_31] : memref<1x1x1x16x128xf32, #tpu.memory_space<vmem>>, vector<1x1x1x16x128xf32>
    %26 = vector.shape_cast %25 : vector<1x1x1x16x128xf32> to vector<16x128xf32>
    %27 = vector.shape_cast %24 : vector<16x128xf32> to vector<1x1x1x16x128xf32>
    tpu.vector_store %arg6[%c0_27, %c0_28, %c0_29, %c0_30, %c0_31], %27 {strides = array<i32>} : memref<1x1x1x16x128xf32, #tpu.memory_space<vmem>>, vector<1x1x1x16x128xf32>,
    return
  }
  func.func @transform_0(%arg0: i32, %arg1: i32, %arg2: i32) -> (i32, i32, i32, i32, i32) {
    %c0_i32 = arith.constant 0 : i32
    %c0_i32_0 = arith.constant 0 : i32
    %c0_i32_1 = arith.constant 0 : i32
    return %arg0, %arg1, %arg2, %c0_i32, %c0_i32_0 : i32, i32, i32, i32, i32
  }
  func.func @transform_1(%arg0: i32, %arg1: i32, %arg2: i32) -> (i32, i32, i32) {
    %c0_i32 = arith.constant 0 : i32
    %c0_i32_0 = arith.constant 0 : i32
    %c0_i32_1 = arith.constant 0 : i32
    %c0_i32_2 = arith.constant 0 : i32
    return %c0_i32, %c0_i32_0, %c0_i32_1 : i32, i32, i32
  }
  func.func @transform_2(%arg0: i32, %arg1: i32, %arg2: i32) -> (i32, i32) {
    %c0_i32 = arith.constant 0 : i32
    %c0_i32_0 = arith.constant 0 : i32
    %c0_i32_1 = arith.constant 0 : i32
    return %c0_i32, %c0_i32_0 : i32, i32
  }
  func.func @transform_3(%arg0: i32, %arg1: i32, %arg2: i32) -> (i32, i32, i32, i32, i32) {
    %c0_i32 = arith.constant 0 : i32
    %c0_i32_0 = arith.constant 0 : i32
    %c0_i32_1 = arith.constant 0 : i32
    return %arg0, %arg1, %arg2, %c0_i32, %c0_i32_0 : i32, i32, i32, i32, i32
  }
}

</mosaic_0001>

<llo_original>
// kernel: tile.8
$region0: #{tile.8}
  #allocation0 [shape = 's32[1]{0}', space=sflag, size = 0x4, scoped, tag = 'scoped memory for tile.8']
  %s0 = inlined_call_operand.vmem [shape: f32[8], index: 0, kind: input, shape index: {}]
  %s1 = inlined_call_operand.vmem [shape: f32[16,8], index: 1, kind: output, shape index: {}]
  // Predicated region
  $region2: #{tile.8} parent=0 // pred_check
    _
  $region3: #{tile.8} parent=0 // pred_check_branch
    %3 = sbr.rel (0) target = $region5
  $region4: #{tile.8} parent=0 // pred_region
    _
  $region5: #{tile.8} parent=0 // pred_fallthru
    _
  %v4 = vld [vmem:[%s0] ss:$0 sm:$0xff]
  %5 = vst [vmem:[%s1] sm:$0xff] %v4
  %s6 = scalar_lea.vmem %s1, 8
  %7 = vst [vmem:[%s6] sm:$0xff] %v4

// kernel: tile.9
$region0: #{tile.9}
  %s0 = inlined_call_operand.vmem [shape: f32[16,8], index: 0, kind: input, shape index: {}]
  %s1 = inlined_call_operand.vmem [shape: f32[1,128], index: 1, kind: output, shape index: {}]
  $region1: #{tile.9} parent=0
    #allocation0 [shape = 'u8[4096]{0}', space=vmem, size = 0x1000, scoped, tag = 'scoped mem for output reshape']
    %v2 = vld [vmem:[%s0] sm:$0x1]
    %vm3 = vcmask 64512
    %4 = vst.msk [vmem:[#allocation0] sm:$0x1] %vm3, %v2
    %s5 = scalar_lea.vmem %s0, 15
    %v6 = vld [vmem:[%s5] sm:$0x1]
    %7 = vrot.lane.b32.xlu0 %v6, 120
    %v8 = vpop.permute.xlu0 %7
    %vm9 = vcmask 1048512
    %10 = vst.msk [vmem:[#allocation0] sm:$0x1] %vm9, %v8
    %s11 = scalar_lea.vmem %s0, 14
    %v12 = vld [vmem:[%s11] sm:$0x1]
    %13 = vrot.lane.b32.xlu0 %v12, 112
    %v14 = vpop.permute.xlu0 %13
    %vm15 = vcmask 982912
    %16 = vst.msk [vmem:[#allocation0] sm:$0x1] %vm15, %v14
    %s17 = scalar_lea.vmem %s0, 13
    %v18 = vld [vmem:[%s17] sm:$0x1]
    %19 = vrot.lane.b32.xlu0 %v18, 104
    %v20 = vpop.permute.xlu0 %19
    %vm21 = vcmask 917312
    %22 = vst.msk [vmem:[#allocation0] sm:$0x1] %vm21, %v20
    %s23 = scalar_lea.vmem %s0, 12
    %v24 = vld [vmem:[%s23] sm:$0x1]
    %25 = vrot.lane.b32.xlu0 %v24, 96
    %v26 = vpop.permute.xlu0 %25
    %vm27 = vcmask 851712
    %28 = vst.msk [vmem:[#allocation0] sm:$0x1] %vm27, %v26
    %s29 = scalar_lea.vmem %s0, 11
    %v30 = vld [vmem:[%s29] sm:$0x1]
    %31 = vrot.lane.b32.xlu0 %v30, 88
    %v32 = vpop.permute.xlu0 %31
    %vm33 = vcmask 786112
    %34 = vst.msk [vmem:[#allocation0] sm:$0x1] %vm33, %v32
    %s35 = scalar_lea.vmem %s0, 10
    %v36 = vld [vmem:[%s35] sm:$0x1]
    %37 = vrot.lane.b32.xlu0 %v36, 80
    %v38 = vpop.permute.xlu0 %37
    %vm39 = vcmask 720512
    %40 = vst.msk [vmem:[#allocation0] sm:$0x1] %vm39, %v38
    %s41 = scalar_lea.vmem %s0, 9
    %v42 = vld [vmem:[%s41] sm:$0x1]
    %43 = vrot.lane.b32.xlu0 %v42, 72
    %v44 = vpop.permute.xlu0 %43
    %vm45 = vcmask 654912
    %46 = vst.msk [vmem:[#allocation0] sm:$0x1] %vm45, %v44
    %s47 = scalar_lea.vmem %s0, 8
    %v48 = vld [vmem:[%s47] sm:$0x1]
    %49 = vrot.lane.b32.xlu0 %v48, 64
    %v50 = vpop.permute.xlu0 %49
    %vm51 = vcmask 589312
    %52 = vst.msk [vmem:[#allocation0] sm:$0x1] %vm51, %v50
    %s53 = scalar_lea.vmem %s0, 7
    %v54 = vld [vmem:[%s53] sm:$0x1]
    %55 = vrot.lane.b32.xlu0 %v54, 56
    %v56 = vpop.permute.xlu0 %55
    %vm57 = vcmask 523712
    %58 = vst.msk [vmem:[#allocation0] sm:$0x1] %vm57, %v56
    %s59 = scalar_lea.vmem %s0, 6
    %v60 = vld [vmem:[%s59] sm:$0x1]
    %61 = vrot.lane.b32.xlu0 %v60, 48
    %v62 = vpop.permute.xlu0 %61
    %vm63 = vcmask 458112
    %64 = vst.msk [vmem:[#allocation0] sm:$0x1] %vm63, %v62
    %s65 = scalar_lea.vmem %s0, 5
    %v66 = vld [vmem:[%s65] sm:$0x1]
    %67 = vrot.lane.b32.xlu0 %v66, 40
    %v68 = vpop.permute.xlu0 %67
    %vm69 = vcmask 392512
    %70 = vst.msk [vmem:[#allocation0] sm:$0x1] %vm69, %v68
    %s71 = scalar_lea.vmem %s0, 4
    %v72 = vld [vmem:[%s71] sm:$0x1]
    %73 = vrot.lane.b32.xlu0 %v72, 32
    %v74 = vpop.permute.xlu0 %73
    %vm75 = vcmask 326912
    %76 = vst.msk [vmem:[#allocation0] sm:$0x1] %vm75, %v74
    %s77 = scalar_lea.vmem %s0, 3
    %v78 = vld [vmem:[%s77] sm:$0x1]
    %79 = vrot.lane.b32.xlu0 %v78, 24
    %v80 = vpop.permute.xlu0 %79
    %vm81 = vcmask 261312
    %82 = vst.msk [vmem:[#allocation0] sm:$0x1] %vm81, %v80
    %s83 = scalar_lea.vmem %s0, 2
    %v84 = vld [vmem:[%s83] sm:$0x1]
    %85 = vrot.lane.b32.xlu0 %v84, 16
    %v86 = vpop.permute.xlu0 %85
    %vm87 = vcmask 195712
    %88 = vst.msk [vmem:[#allocation0] sm:$0x1] %vm87, %v86
    %s89 = scalar_lea.vmem %s0, 1
    %v90 = vld [vmem:[%s89] sm:$0x1]
    %91 = vrot.lane.b32.xlu0 %v90, 8
    %v92 = vpop.permute.xlu0 %91
    %vm93 = vcmask 130112
    %94 = vst.msk [vmem:[#allocation0] sm:$0x1] %vm93, %v92
    %s96 = ssub.s32 2, 1
    %v97 = vld [vmem:[#allocation0] sm:%s96]
    %s99 = ssub.s32 2, 1
    %100 = vst [vmem:[%s1] sm:%s99] %v97

// kernel: single_conv.1
$region0: #{single_conv.1}
  #allocation0 [shape = 'u32[]', space=smem, size = 0x4, offset = 0x4, fixed_abs, tag = 'smem constant byte address 0x4 - core index']
  #allocation1 [shape = 'u32[72,128]{1,0:T(1,128)}', space=vmem, size = 0x9000, scoped, tag = 'internal scratch']
  %s0 = inlined_call_operand.vmem [shape: bf16[2,1,1,18,72], index: 0, kind: input, shape index: {}]
  %s1 = inlined_call_operand.vmem [shape: bf16[3,72,128], index: 1, kind: input, shape index: {}]
  %s2 = inlined_call_operand.vmem [shape: f32[1,128], index: 2, kind: input, shape index: {}]
  %s3 = inlined_call_operand.vmem [shape: f32[2,1,1,16,128], index: 3, kind: output, shape index: {}]
  %s4 = sld [smem:[#allocation0]]
  $region45: #{single_conv.1} parent=0
    _
  %s6 = ssub.s32 1, %s4
  %s7 = scalar_select 0, %s6, %s4
  loop: start=0, step=1, limit=4
  $region2: #{single_conv.1} parent=0 // loop_pre_header
    _
  $region3: #{single_conv.1} parent=0 // loop_header
    %s9 = sphi 0, %s13
    %p10 = scmp.ge.s32.totalorder %s9, 4
    %s16 = sphi 0, %s35
    %s17 = sphi 0, %s31
    %s18 = sphi 0, %s27
    %s19 = sphi 0, %s16
    %s20 = sphi 0, %s17
    %s21 = sphi 0, %s18
    %s22 = sphi 0, %s19
    %s23 = sphi 0, %s20
    %s24 = sphi 0, %s21
    %s42 = sphi 0, %s44
    %s45 = sphi 0, %s42
    %s46 = sphi 0, %s45
    %s62 = sphi 0, %s46
    %s66 = sphi 0, %s66
    %s68 = sphi 0, %s66
    %s69 = sphi 0, %s68
    %s83 = sphi 0, %s69
    %s87 = sphi 0, %s87
    %s89 = sphi 0, %s87
    %s90 = sphi 0, %s89
    %s104 = sphi 0, %s90
    %s114 = sphi 0, %s116
    %s117 = sphi 0, %s114
    %s118 = sphi 0, %s117
    %s134 = sphi 0, %s118
  $region4: #{single_conv.1} parent=0 // loop_header_branch
    %12 = sbr.rel (%p10) target = $region8
  $region5: #{single_conv.1} parent=0 // loop_body
    %s14 = ssub.s32 %s9, 1
    %s15 = ssub.s32 %s9, 2
    %s25 = sadd.s32 1, %s18
    %p26 = scmp.ge.s32.totalorder %s25, 1
    %s27 = scalar_select %p26, 0, %s25
    %s28 = sadd.s32 1, %s17
    %s29 = scalar_select %p26, %s28, %s17
    %p30 = scmp.ge.s32.totalorder %s29, 1
    %s31 = scalar_select %p30, 0, %s29
    %s32 = sadd.s32 1, %s16
    %s33 = scalar_select %p30, %s32, %s16
    %p34 = scmp.ge.s32.totalorder %s33, 2
    %s35 = scalar_select %p34, 0, %s33
    %s36 = ssub.s32 %s16, %s35
    %s37 = ssub.s32 %s17, %s31
    %s38 = sor.u32 %s36, %s37
    %s39 = ssub.s32 %s18, %s27
    %s40 = sor.u32 %s38, %s39
    %p41 = scmp.eq.s32.totalorder %s40, 0
    %s43 = sadd.s32 %s42, 1
    %s44 = scalar_select %p41, %s42, %s43
    %p47 = pneg %p41
    %p48 = scmp.eq.s32.totalorder %s9, 1
    %p49 = por %p47, %p48
    %p50 = scmp.ne.s32.totalorder %s42, %s45
    %p51 = scmp.eq.s32.totalorder %s9, 0
    %p52 = por %p50, %p51
    %p53 = scmp.ne.s32.totalorder %s42, %s45
    %p54 = scmp.eq.s32.totalorder %s14, 1
    %p55 = por %p53, %p54
    %p56 = scmp.ne.s32.totalorder %s45, %s46
    %p57 = scmp.eq.s32.totalorder %s14, 0
    %p58 = por %p56, %p57
    %p59 = scmp.ne.s32.totalorder %s45, %s46
    %p60 = scmp.eq.s32.totalorder %s15, 1
    %p61 = por %p59, %p60
    %p63 = scmp.ne.s32.totalorder %s46, %s62
    %p64 = scmp.eq.s32.totalorder %s15, 0
    %p65 = por %p63, %p64
    %s67 = sadd.s32 %s66, 1
    %p70 = scmp.eq.s32.totalorder %s9, 1
    %p71 = scmp.ne.s32.totalorder %s66, %s68
    %p72 = scmp.eq.s32.totalorder %s9, 0
    %p73 = por %p71, %p72
    %p74 = scmp.ne.s32.totalorder %s66, %s68
    %p75 = scmp.eq.s32.totalorder %s14, 1
    %p76 = por %p74, %p75
    %p77 = scmp.ne.s32.totalorder %s68, %s69
    %p78 = scmp.eq.s32.totalorder %s14, 0
    %p79 = por %p77, %p78
    %p80 = scmp.ne.s32.totalorder %s68, %s69
    %p81 = scmp.eq.s32.totalorder %s15, 1
    %p82 = por %p80, %p81
    %p84 = scmp.ne.s32.totalorder %s69, %s83
    %p85 = scmp.eq.s32.totalorder %s15, 0
    %p86 = por %p84, %p85
    %s88 = sadd.s32 %s87, 1
    %p91 = scmp.eq.s32.totalorder %s9, 1
    %p92 = scmp.ne.s32.totalorder %s87, %s89
    %p93 = scmp.eq.s32.totalorder %s9, 0
    %p94 = por %p92, %p93
    %p95 = scmp.ne.s32.totalorder %s87, %s89
    %p96 = scmp.eq.s32.totalorder %s14, 1
    %p97 = por %p95, %p96
    %p98 = scmp.ne.s32.totalorder %s89, %s90
    %p99 = scmp.eq.s32.totalorder %s14, 0
    %p100 = por %p98, %p99
    %p101 = scmp.ne.s32.totalorder %s89, %s90
    %p102 = scmp.eq.s32.totalorder %s15, 1
    %p103 = por %p101, %p102
    %p105 = scmp.ne.s32.totalorder %s90, %s104
    %p106 = scmp.eq.s32.totalorder %s15, 0
    %p107 = por %p105, %p106
    %s108 = ssub.s32 %s16, %s35
    %s109 = ssub.s32 %s17, %s31
    %s110 = sor.u32 %s108, %s109
    %s111 = ssub.s32 %s18, %s27
    %s112 = sor.u32 %s110, %s111
    %p113 = scmp.eq.s32.totalorder %s112, 0
    %s115 = sadd.s32 %s114, 1
    %s116 = scalar_select %p113, %s114, %s115
    %p119 = pneg %p113
    %p120 = scmp.eq.s32.totalorder %s9, 1
    %p121 = por %p119, %p120
    %p122 = scmp.ne.s32.totalorder %s114, %s117
    %p123 = scmp.eq.s32.totalorder %s9, 0
    %p124 = por %p122, %p123
    %p125 = scmp.ne.s32.totalorder %s114, %s117
    %p126 = scmp.eq.s32.totalorder %s14, 1
    %p127 = por %p125, %p126
    %p128 = scmp.ne.s32.totalorder %s117, %s118
    %p129 = scmp.eq.s32.totalorder %s14, 0
    %p130 = por %p128, %p129
    %p131 = scmp.ne.s32.totalorder %s117, %s118
    %p132 = scmp.eq.s32.totalorder %s15, 1
    %p133 = por %p131, %p132
    %p135 = scmp.ne.s32.totalorder %s118, %s134
    %p136 = scmp.eq.s32.totalorder %s15, 0
    %p137 = por %p135, %p136
    %p138 = scmp.le.s32.totalorder 1, %s9
    %p139 = scmp.lt.s32.totalorder %s9, 3
    %p140 = pnand %p138, %p139
    %p141 = pneg %p140
    // Predicated region
    $region9: #{single_conv.1} parent=5 // pred_check
      _
    $region10: #{single_conv.1} parent=5 // pred_check_branch
      %143 = sbr.rel (%p140) target = $region12
    $region11: #{single_conv.1} parent=5 // pred_region
      %s144 = ssub.s32 %s9, 1
      // Predicated region
      $region13: #{single_conv.1} parent=11 // pred_check
        %p145 = pneg %p79
      $region14: #{single_conv.1} parent=11 // pred_check_branch
        %147 = sbr.rel (%p145) target = $region16
      $region15: #{single_conv.1} parent=11 // pred_region
        _
      $region16: #{single_conv.1} parent=11 // pred_fallthru
        _
      // Predicated region
      $region17: #{single_conv.1} parent=11 // pred_check
        %p148 = pneg %p100
      $region18: #{single_conv.1} parent=11 // pred_check_branch
        %150 = sbr.rel (%p148) target = $region20
      $region19: #{single_conv.1} parent=11 // pred_region
        _
      $region20: #{single_conv.1} parent=11 // pred_fallthru
        _
    $region12: #{single_conv.1} parent=5 // pred_fallthru
      _
    %p151 = scmp.lt.s32.totalorder %s9, 2
    // Predicated region
    $region21: #{single_conv.1} parent=5 // pred_check
      %p152 = pneg %p151
    $region22: #{single_conv.1} parent=5 // pred_check_branch
      %154 = sbr.rel (%p152) target = $region24
    $region23: #{single_conv.1} parent=5 // pred_region
      // Predicated region
      $region25: #{single_conv.1} parent=23 // pred_check
        %p155 = pneg %p52
      $region26: #{single_conv.1} parent=23 // pred_check_branch
        %157 = sbr.rel (%p155) target = $region28
      $region27: #{single_conv.1} parent=23 // pred_region
        %p158 = scmp.lt.s32.totalorder %s16, 1
        %s159 = scalar_select %p158, %s16, 1
        %p160 = scmp.lt.s32.totalorder %s17, 0
        %s161 = scalar_select %p160, %s17, 0
        %p162 = scmp.lt.s32.totalorder %s18, 0
        %s163 = scalar_select %p162, %s18, 0
        %s164 = smul.addr %s163, 3
        %s165 = smul.addr %s161, 3
        %s166 = sadd.s32 %s164, %s165
        %s167 = smul.addr %s159, 3
        %s168 = sadd.s32 %s166, %s167
        %s169 = smul.addr %s168, 4
        %s170 = scalar_lea.vmem %s0, %s169
      $region28: #{single_conv.1} parent=23 // pred_fallthru
        _
    $region24: #{single_conv.1} parent=5 // pred_fallthru
      _
    %p171 = scmp.le.s32.totalorder 1, %s9
    %p172 = scmp.lt.s32.totalorder %s9, 3
    %p173 = pnand %p171, %p172
    %p174 = pneg %p173
    // Predicated region
    $region29: #{single_conv.1} parent=5 // pred_check
      _
    $region30: #{single_conv.1} parent=5 // pred_check_branch
      %176 = sbr.rel (%p173) target = $region32
    $region31: #{single_conv.1} parent=5 // pred_region
      %s177 = ssub.s32 %s9, 1
      %p178 = scmp.lt.s32.totalorder %s19, 1
      %s179 = scalar_select %p178, %s19, 1
      %p180 = scmp.lt.s32.totalorder %s20, 0
      %s181 = scalar_select %p180, %s20, 0
      %p182 = scmp.lt.s32.totalorder %s21, 0
      %s183 = scalar_select %p182, %s21, 0
      %s184 = smul.addr %s183, 3
      %s185 = smul.addr %s181, 3
      %s186 = sadd.s32 %s184, %s185
      %s187 = smul.addr %s179, 3
      %s188 = sadd.s32 %s186, %s187
      %s189 = smul.addr %s188, 4
      %s190 = scalar_lea.vmem %s0, %s189
      %p191 = pneg %p58
      %p192 = pneg %p55
      %p193 = pneg %p79
      %p194 = pneg %p76
      %p195 = pneg %p100
      %p196 = pneg %p97
      %p197 = pneg %p130
      %p198 = pneg %p127
      %p199 = scmp.lt.s32.totalorder %s19, 1
      %s200 = scalar_select %p199, %s19, 1
      %p201 = scmp.lt.s32.totalorder %s20, 0
      %s202 = scalar_select %p201, %s20, 0
      %p203 = scmp.lt.s32.totalorder %s21, 0
      %s204 = scalar_select %p203, %s21, 0
      %s205 = smul.addr %s204, 2
      %s206 = smul.addr %s202, 2
      %s207 = sadd.s32 %s205, %s206
      %s208 = smul.addr %s200, 2
      %s209 = sadd.s32 %s207, %s208
      %s210 = smul.addr %s209, 8
      %s211 = scalar_lea.vmem %s3, %s210
      %p212 = scmp.lt.s32.totalorder %s19, 1
      %s213 = scalar_select %p212, %s19, 1
      %p214 = scmp.lt.s32.totalorder %s20, 0
      %s215 = scalar_select %p214, %s20, 0
      %p216 = scmp.lt.s32.totalorder %s21, 0
      %s217 = scalar_select %p216, %s21, 0
      %s218 = smul.addr %s217, 3
      %s219 = smul.addr %s215, 3
      %s220 = sadd.s32 %s218, %s219
      %s221 = smul.addr %s213, 3
      %s222 = sadd.s32 %s220, %s221
      %s223 = smul.addr %s222, 4
      %s224 = scalar_lea.vmem %s0, %s223
      %p225 = scmp.lt.s32.totalorder %s19, 1
      %s226 = scalar_select %p225, %s19, 1
      %p227 = scmp.lt.s32.totalorder %s20, 0
      %s228 = scalar_select %p227, %s20, 0
      %p229 = scmp.lt.s32.totalorder %s21, 0
      %s230 = scalar_select %p229, %s21, 0
      %s231 = smul.addr %s230, 2
      %s232 = smul.addr %s228, 2
      %s233 = sadd.s32 %s231, %s232
      %s234 = smul.addr %s226, 2
      %s235 = sadd.s32 %s233, %s234
      %s236 = smul.addr %s235, 8
      %s237 = scalar_lea.vmem %s3, %s236
      %v239 = vld [vmem:[%s224] sm:$0xf]
      %v240 = vld [vmem:[%s224 + $0x4] sm:$0xf]
      %v241 = vld [vmem:[%s1] sm:$0xf]
      %v242 = vld [vmem:[%s1 + $0x4] sm:$0xf]
      %v243 = vld [vmem:[%s1 + $0x8] sm:$0xf]
      %v244 = vld [vmem:[%s1 + $0xc] sm:$0xf]
      %v245 = vld [vmem:[%s1 + $0x10] sm:$0xf]
      %v246 = vld [vmem:[%s1 + $0x14] sm:$0xf]
      %v247 = vld [vmem:[%s1 + $0x18] sm:$0xf]
      %v248 = vld [vmem:[%s1 + $0x1c] sm:$0xf]
      %v249 = vld [vmem:[%s1 + $0x20] sm:$0xf]
      %v250 = vld [vmem:[%s224 + $0x8] sm:$0x1]
      %s251 = scalar_lea.vmem %s1, 36
      %v252 = vld [vmem:[%s251] sm:$0xf]
      %v253 = vld [vmem:[%s251 + $0x4] sm:$0xf]
      %v254 = vld [vmem:[%s251 + $0x8] sm:$0xf]
      %v255 = vld [vmem:[%s251 + $0xc] sm:$0xf]
      %v256 = vld [vmem:[%s251 + $0x10] sm:$0xf]
      %v257 = vld [vmem:[%s251 + $0x14] sm:$0xf]
      %v258 = vld [vmem:[%s251 + $0x18] sm:$0xf]
      %v259 = vld [vmem:[%s251 + $0x1c] sm:$0xf]
      %v260 = vld [vmem:[%s251 + $0x20] sm:$0xf]
      %v264 = vunpack.c.l.b16 %v239
      %v265 = vunpack.c.l.b16 %v240
      %v266 = vunpack.c.l.b16 %v250
      %v267 = vpack.c.b16 %v265, %v264
      %v268 = vpack.c.b16 %v266, %v266
      %vm269 = vsmask.f32 7424
      %v271 = vshrl.u32 %v267, 16
      %v273 = vshll.u32 %v267, 16
      %v275 = vrot.slane %v273, 1
      %v276 = vor.u32 %v271, %v275
      %v278 = vshll.u32 %v268, 16
      %v280 = vrot.slane %v278, 1
      %v281 = vsel %vm269, %v276, %v280
      %v291 = vunpack.c.l.b16 %v252
      %v292 = vunpack.c.l.b16 %v253
      %v293 = vunpack.c.l.b16 %v254
      %v294 = vunpack.c.l.b16 %v255
      %v295 = vunpack.c.l.b16 %v256
      %v296 = vunpack.c.l.b16 %v257
      %v297 = vunpack.c.l.b16 %v258
      %v298 = vunpack.c.l.b16 %v259
      %v299 = vunpack.c.l.b16 %v260
      %v300 = vpack.c.b16 %v292, %v291
      %v301 = vpack.c.b16 %v294, %v293
      %v302 = vpack.c.b16 %v296, %v295
      %v303 = vpack.c.b16 %v298, %v297
      %v304 = vpack.c.b16 %v299, %v299
      %vm309 = vcmask 588800
      %v311 = vsel %vm309, %v281, 0
      %vm313 = vcmask 1043456
      %v315 = vsel %vm313, %v304, 0
      %317 = vmatpush.bf16.msra.mxu0 0
      %318 = vmatpush.bf16.msra.mxu0 0
      %319 = vmatpush.bf16.msra.mxu0 0
      %320 = vmatpush.bf16.msra.mxu0 %v315
      %321 = vmatpush.bf16.msra.mxu0 %v303
      %322 = vmatpush.bf16.msra.mxu0 %v302
      %323 = vmatpush.bf16.msra.mxu0 %v301
      %324 = vmatpush.bf16.msra.mxu0 %v300
      %325 = vmatmul.bf16.gmra.mxu0 %v311
      %v326 = vpop.f32.mrf.mxu0
      %v327 = vadd.f32 0.0, %v326
      %v328 = vpop.f32.mrf.mxu0
      %v329 = vadd.f32 0.0, %v328
      %330 = vdwg.mxu0
      %v340 = vunpack.c.l.b16 %v241
      %v341 = vunpack.c.l.b16 %v242
      %v342 = vunpack.c.l.b16 %v243
      %v343 = vunpack.c.l.b16 %v244
      %v344 = vunpack.c.l.b16 %v245
      %v345 = vunpack.c.l.b16 %v246
      %v346 = vunpack.c.l.b16 %v247
      %v347 = vunpack.c.l.b16 %v248
      %v348 = vunpack.c.l.b16 %v249
      %v349 = vpack.c.b16 %v341, %v340
      %v350 = vpack.c.b16 %v343, %v342
      %v351 = vpack.c.b16 %v345, %v344
      %v352 = vpack.c.b16 %v347, %v346
      %v353 = vpack.c.b16 %v348, %v348
      %v358 = vsel %vm309, %v267, 0
      %v361 = vsel %vm313, %v353, 0
      %363 = vmatpush.bf16.msra.mxu0 0
      %364 = vmatpush.bf16.msra.mxu0 0
      %365 = vmatpush.bf16.msra.mxu0 0
      %366 = vmatpush.bf16.msra.mxu0 %v361
      %367 = vmatpush.bf16.msra.mxu0 %v352
      %368 = vmatpush.bf16.msra.mxu0 %v351
      %369 = vmatpush.bf16.msra.mxu0 %v350
      %370 = vmatpush.bf16.msra.mxu0 %v349
      %371 = vmatmul.bf16.gmra.mxu0 %v358
      %v372 = vpop.f32.mrf.mxu0
      %v373 = vadd.f32 %v327, %v372
      %v374 = vpop.f32.mrf.mxu0
      %v375 = vadd.f32 %v329, %v374
      %376 = vdwg.mxu0
      %v377 = vld [vmem:[%s224] sm:$0xe]
      %s378 = scalar_lea.vmem %s1, 72
      %v379 = vld [vmem:[%s378] sm:$0xf]
      %v380 = vld [vmem:[%s378 + $0x4] sm:$0xf]
      %v381 = vld [vmem:[%s378 + $0x8] sm:$0xf]
      %v382 = vld [vmem:[%s378 + $0xc] sm:$0xf]
      %v383 = vld [vmem:[%s378 + $0x10] sm:$0xf]
      %v384 = vld [vmem:[%s378 + $0x14] sm:$0xf]
      %v385 = vld [vmem:[%s378 + $0x18] sm:$0xf]
      %v386 = vld [vmem:[%s378 + $0x1c] sm:$0xf]
      %v387 = vld [vmem:[%s378 + $0x20] sm:$0xf]
      %v389 = vunpack.c.l.b16 %v377
      %v390 = vpack.c.b16 %v265, %v389
      %vm391 = vcmask 1046528
      %v392 = vrot.slane %v390, 1
      %v393 = vrot.slane %v268, 1
      %v394 = vsel %vm391, %v392, %v393
      %v404 = vunpack.c.l.b16 %v379
      %v405 = vunpack.c.l.b16 %v380
      %v406 = vunpack.c.l.b16 %v381
      %v407 = vunpack.c.l.b16 %v382
      %v408 = vunpack.c.l.b16 %v383
      %v409 = vunpack.c.l.b16 %v384
      %v410 = vunpack.c.l.b16 %v385
      %v411 = vunpack.c.l.b16 %v386
      %v412 = vunpack.c.l.b16 %v387
      %v413 = vpack.c.b16 %v405, %v404
      %v414 = vpack.c.b16 %v407, %v406
      %v415 = vpack.c.b16 %v409, %v408
      %v416 = vpack.c.b16 %v411, %v410
      %v417 = vpack.c.b16 %v412, %v412
      %v423 = vsel %vm309, %v394, 0
      %v426 = vsel %vm313, %v417, 0
      %428 = vmatpush.bf16.msra.mxu0 0
      %429 = vmatpush.bf16.msra.mxu0 0
      %430 = vmatpush.bf16.msra.mxu0 0
      %431 = vmatpush.bf16.msra.mxu0 %v426
      %432 = vmatpush.bf16.msra.mxu0 %v416
      %433 = vmatpush.bf16.msra.mxu0 %v415
      %434 = vmatpush.bf16.msra.mxu0 %v414
      %435 = vmatpush.bf16.msra.mxu0 %v413
      %436 = vmatmul.bf16.gmra.mxu0 %v423
      %v437 = vpop.f32.mrf.mxu0
      %v438 = vadd.f32 0.0, %v437
      %v439 = vpop.f32.mrf.mxu0
      %v440 = vadd.f32 0.0, %v439
      %441 = vdwg.mxu0
      %v442 = vadd.f32 %v373, %v438
      %v443 = vadd.f32 %v375, %v440
      %v444 = vld [vmem:[%s2] sm:$0x1]
      %v446 = vperm.slane %v444, 0
      %v448 = vadd.f32 %v442, %v446
      %v449 = vadd.f32 %v443, %v446
      %v450 = vmul.f32 %v448, 0.2
      %v451 = vmul.f32 %v449, 0.2
      %v452 = vmax.f32 %v448, %v450
      %v453 = vmax.f32 %v449, %v451
      %454 = vst [vmem:[%s237] sm:$0xff] %v452
      %455 = vst [vmem:[%s237 + $0x8] sm:$0xff] %v453
      %p456 = scmp.lt.s32.totalorder %s19, 1
      %s457 = scalar_select %p456, %s19, 1
      %p458 = scmp.lt.s32.totalorder %s20, 0
      %s459 = scalar_select %p458, %s20, 0
      %p460 = scmp.lt.s32.totalorder %s21, 0
      %s461 = scalar_select %p460, %s21, 0
      %s462 = smul.addr %s461, 2
      %s463 = smul.addr %s459, 2
      %s464 = sadd.s32 %s462, %s463
      %s465 = smul.addr %s457, 2
      %s466 = sadd.s32 %s464, %s465
      %s467 = smul.addr %s466, 8
      %s468 = scalar_lea.vmem %s3, %s467
      // Predicated region
      $region33: #{single_conv.1} parent=31 // pred_check
        %p469 = pneg %p127
      $region34: #{single_conv.1} parent=31 // pred_check_branch
        %471 = sbr.rel (%p469) target = $region36
      $region35: #{single_conv.1} parent=31 // pred_region
        _
      $region36: #{single_conv.1} parent=31 // pred_fallthru
        _
    $region32: #{single_conv.1} parent=5 // pred_fallthru
      _
    %p472 = scmp.le.s32.totalorder 2, %s9
    // Predicated region
    $region37: #{single_conv.1} parent=5 // pred_check
      %p473 = pneg %p472
    $region38: #{single_conv.1} parent=5 // pred_check_branch
      %475 = sbr.rel (%p473) target = $region40
    $region39: #{single_conv.1} parent=5 // pred_region
      %s476 = ssub.s32 %s9, 2
      // Predicated region
      $region41: #{single_conv.1} parent=39 // pred_check
        %p477 = pneg %p133
      $region42: #{single_conv.1} parent=39 // pred_check_branch
        %479 = sbr.rel (%p477) target = $region44
      $region43: #{single_conv.1} parent=39 // pred_region
        %p480 = scmp.lt.s32.totalorder %s22, 1
        %s481 = scalar_select %p480, %s22, 1
        %p482 = scmp.lt.s32.totalorder %s23, 0
        %s483 = scalar_select %p482, %s23, 0
        %p484 = scmp.lt.s32.totalorder %s24, 0
        %s485 = scalar_select %p484, %s24, 0
        %s486 = smul.addr %s485, 2
        %s487 = smul.addr %s483, 2
        %s488 = sadd.s32 %s486, %s487
        %s489 = smul.addr %s481, 2
        %s490 = sadd.s32 %s488, %s489
        %s491 = smul.addr %s490, 8
        %s492 = scalar_lea.vmem %s3, %s491
      $region44: #{single_conv.1} parent=39 // pred_fallthru
        _
    $region40: #{single_conv.1} parent=5 // pred_fallthru
      _
  $region6: #{single_conv.1} parent=0 // loop_footer
    %s13 = sadd.s32 1, %s9
  $region7: #{single_conv.1} parent=0 // loop_footer_branch
    %8 = sbr.rel target = $region3
  $region8: #{single_conv.1} parent=0 // loop_exit
    _

</llo_original>
